<compile_context>
chip_gen: v6e
topology: v6e:2x2x1
jax: 0.10.0
libtpu: 0.0.40
codegen_flags: <defaults>
</compile_context>

<pallas_src>
import functools

import jax
import jax.numpy as jnp
from jax import lax
from jax.experimental import pallas as pl
from jax.experimental.pallas import tpu as pltpu

_LANE = 128
_TM_MAX = 1024   # rows per tile (multiple of 8); 512 KiB f32 per input stream
_NCORES = 2      # leading 'parallel' grid axis (megacore split on v7x)


def _round_up(a: int, b: int) -> int:
    return -(-a // b) * b


def _loss_reduce_kernel(nvalid_ref, x_ref, t_ref, out_ref, *,
                        tm: int, tiles_per_core: int, compute_jaccard: bool):
    """Accumulate per-lane partial sums into the resident output block.

    out_ref block: (1, n_red, 8, 128) with
      red 0: sum of per-element BCE-with-logits
      red 1: sum of sigmoid(x) over targets == 1   (intersection)   [jaccard only]
      red 2: sum of sigmoid(x)                                        [jaccard only]
      red 3: count of targets == 1                                    [jaccard only]
    """
    c = pl.program_id(0)   # parallel (core) axis
    i = pl.program_id(1)   # reduction axis

    @pl.when(i == 0)
    def _():
        out_ref[...] = jnp.zeros_like(out_ref)

    x = x_ref[...].astype(jnp.float32)
    t = t_ref[...].astype(jnp.float32)

    # Validity mask from the global linear element index vs n_valid.
    block_idx = c * tiles_per_core + i
    base = block_idx * (tm * _LANE)
    row_ids = lax.broadcasted_iota(jnp.int32, (tm, _LANE), 0)
    col_ids = lax.broadcasted_iota(jnp.int32, (tm, _LANE), 1)
    idx = base + row_ids * _LANE + col_ids
    valid = idx < nvalid_ref[0]

    # Shared transcendental chain.
    e = jnp.exp(-jnp.abs(x))

    # Numerically-stable BCEWithLogits per-element term:
    #   max(x, 0) - x*t + log(1 + exp(-|x|))
    bce = jnp.maximum(x, 0.0) - x * t + jnp.log1p(e)
    bce = jnp.where(valid, bce, 0.0)
    out_ref[0, 0] += bce.reshape(tm // 8, 8, _LANE).sum(axis=0)

    if compute_jaccard:
        # sigmoid(x) = where(x >= 0, 1, e) / (1 + e)   (reuses e)
        sig = jnp.where(x >= 0.0, 1.0, e) / (1.0 + e)
        t_pos = valid & (t == 1.0)
        out_ref[0, 1] += jnp.where(t_pos, sig, 0.0).reshape(tm // 8, 8, _LANE).sum(axis=0)
        out_ref[0, 2] += jnp.where(valid, sig, 0.0).reshape(tm // 8, 8, _LANE).sum(axis=0)
        out_ref[0, 3] += t_pos.astype(jnp.float32).reshape(tm // 8, 8, _LANE).sum(axis=0)


@functools.partial(jax.jit, static_argnames=("jaccard_weight",))
def loss_binary(outputs: jnp.ndarray, targets: jnp.ndarray, jaccard_weight: float = 0.0):
    """JAX/Pallas equivalent of LossBinary(jaccard_weight)(outputs, targets)."""
    if outputs.shape != targets.shape:
        raise ValueError(f"shape mismatch: {outputs.shape} vs {targets.shape}")

    n = outputs.size
    rows_needed = -(-n // _LANE)
    tm = min(_TM_MAX, _round_up(rows_needed, 8))
    tiles = _round_up(max(1, -(-rows_needed // tm)), _NCORES)
    tiles_per_core = tiles // _NCORES
    padded_rows = tiles * tm
    pad = padded_rows * _LANE - n

    def to_slab(a):
        flat = a.reshape(-1)              # native dtype; cast happens in-kernel
        if pad:
            flat = jnp.pad(flat, (0, pad))
        return flat.reshape(padded_rows, _LANE)

    x_slab = to_slab(outputs)
    t_slab = to_slab(targets)
    n_valid = jnp.array([n], dtype=jnp.int32)

    compute_jaccard = bool(jaccard_weight)
    n_red = 4 if compute_jaccard else 1

    kernel = functools.partial(
        _loss_reduce_kernel,
        tm=tm,
        tiles_per_core=tiles_per_core,
        compute_jaccard=compute_jaccard,
    )

    tile_spec = pl.BlockSpec((tm, _LANE), lambda c, i, nv: (c * tiles_per_core + i, 0))
    partials = pl.pallas_call(
        kernel,
        out_shape=jax.ShapeDtypeStruct((_NCORES, n_red, 8, _LANE), jnp.float32),
        grid_spec=pltpu.PrefetchScalarGridSpec(
            num_scalar_prefetch=1,
            grid=(_NCORES, tiles_per_core),
            in_specs=[tile_spec, tile_spec],
            out_specs=pl.BlockSpec((1, n_red, 8, _LANE), lambda c, i, nv: (c, 0, 0, 0)),
        ),
        compiler_params=pltpu.CompilerParams(
            dimension_semantics=("parallel", "arbitrary"),
        ),
    )(n_valid, x_slab, t_slab)

    sums = jnp.sum(partials, axis=(0, 2, 3))   # (n_red,) — tiny, cheap in XLA
    bce_mean = sums[0] / jnp.float32(n)
    loss = (1.0 - jaccard_weight) * bce_mean
    if compute_jaccard:
        eps = 1e-15
        intersection, sig_sum, tgt_sum = sums[1], sums[2], sums[3]
        union = sig_sum + tgt_sum
        loss = loss + jaccard_weight * (
            1.0 - (intersection + eps) / (union - intersection + eps)
        )
    return loss


def _reference(outputs, targets, jaccard_weight=0.0):
    x = outputs.astype(jnp.float32)
    t = targets.astype(jnp.float32)
    bce = jnp.maximum(x, 0.0) - x * t + jnp.log1p(jnp.exp(-jnp.abs(x)))
    loss = (1.0 - jaccard_weight) * jnp.mean(bce)
    if jaccard_weight:
        eps = 1e-15
        jt = (t == 1.0).astype(jnp.float32)
        jo = jax.nn.sigmoid(x)
        inter = jnp.sum(jo * jt)
        union = jnp.sum(jo) + jnp.sum(jt)
        loss = loss + jaccard_weight * (1.0 - (inter + eps) / (union - inter + eps))
    return loss


if __name__ == "__main__":
    key = jax.random.PRNGKey(0)
    k1, k2 = jax.random.split(key)
    # NCHW-shaped logits and binary targets, small sizes.
    outputs = jax.random.normal(k1, (2, 4, 16, 16), dtype=jnp.float32)
    targets = (jax.random.uniform(k2, (2, 4, 16, 16)) > 0.5).astype(jnp.float32)

    # jaccard_weight = 0 case (pure BCE, specialized kernel) and a weighted case.
    loss0 = loss_binary(outputs, targets, jaccard_weight=0.0)
    loss1 = loss_binary(outputs, targets, jaccard_weight=0.3)
    jax.block_until_ready((loss0, loss1))

    ref0 = _reference(outputs, targets, 0.0)
    ref1 = _reference(outputs, targets, 0.3)
    assert jnp.allclose(loss0, ref0, rtol=1e-5, atol=1e-5), (loss0, ref0)
    assert jnp.allclose(loss1, ref1, rtol=1e-5, atol=1e-5), (loss1, ref1)

    print("KERNEL_OK")
</pallas_src>

<mosaic_0001>
module attributes {stable_mosaic.version = 11 : i64} {
  func.func @_loss_reduce_kernel(%arg0: i32, %arg1: i32, %arg2: memref<1xi32, #tpu.memory_space<smem>>, %arg3: memref<16x128xf32, #tpu.memory_space<vmem>>, %arg4: memref<16x128xf32, #tpu.memory_space<vmem>>, %arg5: memref<1x1x8x128xf32, #tpu.memory_space<vmem>>) attributes {dimension_semantics = [#tpu.dimension_semantics<parallel>, #tpu.dimension_semantics<arbitrary>], iteration_bounds = array<i64: 2, 1>, scalar_prefetch = 1 : i64, scratch_operands = 0 : i64, tpu.core_type = #tpu.core_type<tc>, window_params = [{transform_indices = @transform_0, window_bounds = array<i64: 16, 128>}, {transform_indices = @transform_1, window_bounds = array<i64: 16, 128>}, {transform_indices = @transform_2, window_bounds = array<i64: 1, 1, 8, 128>}]} {
    %c0_i32 = arith.constant 0 : i32
    %0 = arith.cmpi eq, %arg1, %c0_i32 : i32
    %1 = arith.extui %0 : i1 to i32
    %c0_i32_0 = arith.constant 0 : i32
    %2 = arith.cmpi ne, %1, %c0_i32_0 : i32
    scf.if %2 {
      %cst_16 = arith.constant 0.000000e+00 : f32
      %38 = vector.broadcast %cst_16 : f32 to vector<1x1x8x128xf32>
      %c0_17 = arith.constant 0 : index
      %c0_18 = arith.constant 0 : index
      %c0_19 = arith.constant 0 : index
      %c0_20 = arith.constant 0 : index
      %39 = vector.load %arg5[%c0_17, %c0_18, %c0_19, %c0_20] : memref<1x1x8x128xf32, #tpu.memory_space<vmem>>, vector<1x1x8x128xf32>
      tpu.vector_store %arg5[%c0_17, %c0_18, %c0_19, %c0_20], %38 {strides = array<i32>} : memref<1x1x8x128xf32, #tpu.memory_space<vmem>>, vector<1x1x8x128xf32>,
    } else {
    }
    %c0 = arith.constant 0 : index
    %c0_1 = arith.constant 0 : index
    %3 = vector.load %arg3[%c0, %c0_1] : memref<16x128xf32, #tpu.memory_space<vmem>>, vector<16x128xf32>
    %c0_2 = arith.constant 0 : index
    %c0_3 = arith.constant 0 : index
    %4 = vector.load %arg4[%c0_2, %c0_3] : memref<16x128xf32, #tpu.memory_space<vmem>>, vector<16x128xf32>
    %c1_i32 = arith.constant 1 : i32
    %5 = arith.muli %arg0, %c1_i32 : i32
    %6 = arith.addi %5, %arg1 : i32
    %c2048_i32 = arith.constant 2048 : i32
    %7 = arith.muli %6, %c2048_i32 : i32
    %8 = tpu.iota {dimensions = array<i32: 0>} : vector<16x128xi32>
    %9 = tpu.iota {dimensions = array<i32: 1>} : vector<16x128xi32>
    %c128_i32 = arith.constant 128 : i32
    %10 = vector.broadcast %c128_i32 : i32 to vector<16x128xi32>
    %11 = arith.muli %8, %10 : vector<16x128xi32>
    %12 = vector.broadcast %7 : i32 to vector<16x128xi32>
    %13 = arith.addi %12, %11 : vector<16x128xi32>
    %14 = arith.addi %13, %9 : vector<16x128xi32>
    %c0_4 = arith.constant 0 : index
    %15 = memref.load %arg2[%c0_4] : memref<1xi32, #tpu.memory_space<smem>>
    %16 = vector.broadcast %15 : i32 to vector<16x128xi32>
    %17 = arith.cmpi slt, %14, %16 : vector<16x128xi32>
    %18 = math.absf %3 : vector<16x128xf32>
    %cst = arith.constant 0.000000e+00 : f32
    %19 = vector.broadcast %cst : f32 to vector<16x128xf32>
    %20 = arith.subf %19, %18 : vector<16x128xf32>
    %21 = math.exp %20 : vector<16x128xf32>
    %cst_5 = arith.constant 0.000000e+00 : f32
    %22 = vector.broadcast %cst_5 : f32 to vector<16x128xf32>
    %23 = arith.maximumf %3, %22 : vector<16x128xf32>
    %24 = arith.mulf %3, %4 : vector<16x128xf32>
    %25 = arith.subf %23, %24 : vector<16x128xf32>
    %26 = math.log1p %21 : vector<16x128xf32>
    %27 = arith.addf %25, %26 : vector<16x128xf32>
    %cst_6 = arith.constant 0.000000e+00 : f32
    %28 = vector.broadcast %cst_6 : f32 to vector<16x128xf32>
    %29 = arith.select %17, %27, %28 : vector<16x128xi1>, vector<16x128xf32>
    %c0_7 = arith.constant 0 : index
    %c0_8 = arith.constant 0 : index
    %c0_9 = arith.constant 0 : index
    %c0_10 = arith.constant 0 : index
    %30 = vector.load %arg5[%c0_7, %c0_8, %c0_9, %c0_10] : memref<1x1x8x128xf32, #tpu.memory_space<vmem>>, vector<1x1x8x128xf32>
    %31 = vector.shape_cast %30 : vector<1x1x8x128xf32> to vector<8x128xf32>
    %32 = vector.shape_cast %29 : vector<16x128xf32> to vector<2x8x128xf32>
    %cst_11 = arith.constant dense<0.000000e+00> : vector<8x128xf32>
    %33 = vector.multi_reduction <add>, %32, %cst_11 [0] : vector<2x8x128xf32> to vector<8x128xf32>
    %34 = arith.addf %31, %33 : vector<8x128xf32>
    %c0_12 = arith.constant 0 : index
    %c0_13 = arith.constant 0 : index
    %c0_14 = arith.constant 0 : index
    %c0_15 = arith.constant 0 : index
    %35 = vector.load %arg5[%c0_12, %c0_13, %c0_14, %c0_15] : memref<1x1x8x128xf32, #tpu.memory_space<vmem>>, vector<1x1x8x128xf32>
    %36 = vector.shape_cast %35 : vector<1x1x8x128xf32> to vector<8x128xf32>
    %37 = vector.shape_cast %34 : vector<8x128xf32> to vector<1x1x8x128xf32>
    tpu.vector_store %arg5[%c0_12, %c0_13, %c0_14, %c0_15], %37 {strides = array<i32>} : memref<1x1x8x128xf32, #tpu.memory_space<vmem>>, vector<1x1x8x128xf32>,
    return
  }
  func.func @transform_0(%arg0: i32, %arg1: i32, %arg2: memref<1xi32, #tpu.memory_space<smem>>) -> (i32, i32) {
    %c1_i32 = arith.constant 1 : i32
    %0 = arith.muli %arg0, %c1_i32 : i32
    %1 = arith.addi %0, %arg1 : i32
    %c0_i32 = arith.constant 0 : i32
    %c0_i32_0 = arith.constant 0 : i32
    return %1, %c0_i32 : i32, i32
  }
  func.func @transform_1(%arg0: i32, %arg1: i32, %arg2: memref<1xi32, #tpu.memory_space<smem>>) -> (i32, i32) {
    %c1_i32 = arith.constant 1 : i32
    %0 = arith.muli %arg0, %c1_i32 : i32
    %1 = arith.addi %0, %arg1 : i32
    %c0_i32 = arith.constant 0 : i32
    %c0_i32_0 = arith.constant 0 : i32
    return %1, %c0_i32 : i32, i32
  }
  func.func @transform_2(%arg0: i32, %arg1: i32, %arg2: memref<1xi32, #tpu.memory_space<smem>>) -> (i32, i32, i32, i32) {
    %c0_i32 = arith.constant 0 : i32
    %c0_i32_0 = arith.constant 0 : i32
    %c0_i32_1 = arith.constant 0 : i32
    %c0_i32_2 = arith.constant 0 : i32
    return %arg0, %c0_i32, %c0_i32_0, %c0_i32_1 : i32, i32, i32, i32
  }
}

</mosaic_0001>

<llo_original>
// kernel: loss_binary.1
$region0: #{loss_binary.1}
  #allocation0 [shape = 'u32[]', space=smem, size = 0x4, offset = 0x4, fixed_abs, tag = 'smem constant byte address 0x4 - core index']
  #allocation1 [shape = 'u32[144,128]{1,0:T(1,128)}', space=vmem, size = 0x12000, scoped, tag = 'internal scratch']
  #allocation2 [shape = 's32[1]{0}', space=sflag, size = 0x4, scoped, tag = 'scoped memory for loss_binary.1']
  #allocation3 [shape = 's32[1]{0:T(128)S(6)}', space=smem, size = 0x200, scoped, tag = 'prefetched SMEM operand 0']
  %s0 = inlined_call_operand.<no memory space> [shape: s32[1], index: 0, kind: input, shape index: {}]
  %s1 = inlined_call_operand.vmem [shape: f32[32,128], index: 1, kind: input, shape index: {}]
  %s2 = inlined_call_operand.vmem [shape: f32[32,128], index: 2, kind: input, shape index: {}]
  %s3 = inlined_call_operand.vmem [shape: f32[2,1,8,128], index: 3, kind: output, shape index: {}]
  %s4 = sld [smem:[#allocation0]]
  $region45: #{loss_binary.1} parent=0
    _
  %s6 = ssub.s32 1, %s4
  %s7 = scalar_select 0, %s6, %s4
  %8 = sst [smem:[#allocation3]] %s0
  loop: start=0, step=1, limit=4
  $region2: #{loss_binary.1} parent=0 // loop_pre_header
    _
  $region3: #{loss_binary.1} parent=0 // loop_header
    %s10 = sphi 0, %s14
    %p11 = scmp.ge.s32.totalorder %s10, 4
    %s17 = sphi 0, %s29
    %s18 = sphi 0, %s25
    %s19 = sphi 0, %s17
    %s20 = sphi 0, %s18
    %s21 = sphi 0, %s19
    %s22 = sphi 0, %s20
    %s34 = sphi 0, %s36
    %s37 = sphi 0, %s34
    %s38 = sphi 0, %s37
    %s54 = sphi 0, %s38
    %s62 = sphi 0, %s64
    %s65 = sphi 0, %s62
    %s66 = sphi 0, %s65
    %s82 = sphi 0, %s66
    %s88 = sphi 0, %s90
    %s91 = sphi 0, %s88
    %s92 = sphi 0, %s91
    %s108 = sphi 0, %s92
  $region4: #{loss_binary.1} parent=0 // loop_header_branch
    %13 = sbr.rel (%p11) target = $region8
  $region5: #{loss_binary.1} parent=0 // loop_body
    %s15 = ssub.s32 %s10, 1
    %s16 = ssub.s32 %s10, 2
    %s23 = sadd.s32 1, %s18
    %p24 = scmp.ge.s32.totalorder %s23, 1
    %s25 = scalar_select %p24, 0, %s23
    %s26 = sadd.s32 1, %s17
    %s27 = scalar_select %p24, %s26, %s17
    %p28 = scmp.ge.s32.totalorder %s27, 2
    %s29 = scalar_select %p28, 0, %s27
    %s30 = sadd.s32 %s17, %s18
    %s31 = sadd.s32 %s29, %s25
    %s32 = ssub.s32 %s30, %s31
    %p33 = scmp.eq.s32.totalorder %s32, 0
    %s35 = sadd.s32 %s34, 1
    %s36 = scalar_select %p33, %s34, %s35
    %p39 = pneg %p33
    %p40 = scmp.eq.s32.totalorder %s10, 1
    %p41 = por %p39, %p40
    %p42 = scmp.ne.s32.totalorder %s34, %s37
    %p43 = scmp.eq.s32.totalorder %s10, 0
    %p44 = por %p42, %p43
    %p45 = scmp.ne.s32.totalorder %s34, %s37
    %p46 = scmp.eq.s32.totalorder %s15, 1
    %p47 = por %p45, %p46
    %p48 = scmp.ne.s32.totalorder %s37, %s38
    %p49 = scmp.eq.s32.totalorder %s15, 0
    %p50 = por %p48, %p49
    %p51 = scmp.ne.s32.totalorder %s37, %s38
    %p52 = scmp.eq.s32.totalorder %s16, 1
    %p53 = por %p51, %p52
    %p55 = scmp.ne.s32.totalorder %s38, %s54
    %p56 = scmp.eq.s32.totalorder %s16, 0
    %p57 = por %p55, %p56
    %s58 = sadd.s32 %s17, %s18
    %s59 = sadd.s32 %s29, %s25
    %s60 = ssub.s32 %s58, %s59
    %p61 = scmp.eq.s32.totalorder %s60, 0
    %s63 = sadd.s32 %s62, 1
    %s64 = scalar_select %p61, %s62, %s63
    %p67 = pneg %p61
    %p68 = scmp.eq.s32.totalorder %s10, 1
    %p69 = por %p67, %p68
    %p70 = scmp.ne.s32.totalorder %s62, %s65
    %p71 = scmp.eq.s32.totalorder %s10, 0
    %p72 = por %p70, %p71
    %p73 = scmp.ne.s32.totalorder %s62, %s65
    %p74 = scmp.eq.s32.totalorder %s15, 1
    %p75 = por %p73, %p74
    %p76 = scmp.ne.s32.totalorder %s65, %s66
    %p77 = scmp.eq.s32.totalorder %s15, 0
    %p78 = por %p76, %p77
    %p79 = scmp.ne.s32.totalorder %s65, %s66
    %p80 = scmp.eq.s32.totalorder %s16, 1
    %p81 = por %p79, %p80
    %p83 = scmp.ne.s32.totalorder %s66, %s82
    %p84 = scmp.eq.s32.totalorder %s16, 0
    %p85 = por %p83, %p84
    %s86 = ssub.s32 %s17, %s29
    %p87 = scmp.eq.s32.totalorder %s86, 0
    %s89 = sadd.s32 %s88, 1
    %s90 = scalar_select %p87, %s88, %s89
    %p93 = pneg %p87
    %p94 = scmp.eq.s32.totalorder %s10, 1
    %p95 = por %p93, %p94
    %p96 = scmp.ne.s32.totalorder %s88, %s91
    %p97 = scmp.eq.s32.totalorder %s10, 0
    %p98 = por %p96, %p97
    %p99 = scmp.ne.s32.totalorder %s88, %s91
    %p100 = scmp.eq.s32.totalorder %s15, 1
    %p101 = por %p99, %p100
    %p102 = scmp.ne.s32.totalorder %s91, %s92
    %p103 = scmp.eq.s32.totalorder %s15, 0
    %p104 = por %p102, %p103
    %p105 = scmp.ne.s32.totalorder %s91, %s92
    %p106 = scmp.eq.s32.totalorder %s16, 1
    %p107 = por %p105, %p106
    %p109 = scmp.ne.s32.totalorder %s92, %s108
    %p110 = scmp.eq.s32.totalorder %s16, 0
    %p111 = por %p109, %p110
    %p112 = scmp.le.s32.totalorder 1, %s10
    %p113 = scmp.lt.s32.totalorder %s10, 3
    %p114 = pnand %p112, %p113
    %p115 = pneg %p114
    // Predicated region
    $region9: #{loss_binary.1} parent=5 // pred_check
      _
    $region10: #{loss_binary.1} parent=5 // pred_check_branch
      %117 = sbr.rel (%p114) target = $region12
    $region11: #{loss_binary.1} parent=5 // pred_region
      %s118 = ssub.s32 %s10, 1
    $region12: #{loss_binary.1} parent=5 // pred_fallthru
      _
    %p119 = scmp.lt.s32.totalorder %s10, 2
    // Predicated region
    $region13: #{loss_binary.1} parent=5 // pred_check
      %p120 = pneg %p119
    $region14: #{loss_binary.1} parent=5 // pred_check_branch
      %122 = sbr.rel (%p120) target = $region16
    $region15: #{loss_binary.1} parent=5 // pred_region
      // Predicated region
      $region17: #{loss_binary.1} parent=15 // pred_check
        %p123 = pneg %p44
      $region18: #{loss_binary.1} parent=15 // pred_check_branch
        %125 = sbr.rel (%p123) target = $region20
      $region19: #{loss_binary.1} parent=15 // pred_region
        %s126 = sadd.s32 %s17, %s18
        %s127 = smul.u32 2, %s126
        %p128 = scmp.lt.s32.totalorder %s127, 3
        %s129 = scalar_select %p128, %s127, 3
        %s130 = smul.addr %s129, 8
        %s131 = scalar_lea.vmem %s1, %s130
        %s132 = sadd.s32 %s17, %s18
        %s133 = smul.u32 2, %s132
      $region20: #{loss_binary.1} parent=15 // pred_fallthru
        _
      // Predicated region
      $region21: #{loss_binary.1} parent=15 // pred_check
        %p134 = pneg %p72
      $region22: #{loss_binary.1} parent=15 // pred_check_branch
        %136 = sbr.rel (%p134) target = $region24
      $region23: #{loss_binary.1} parent=15 // pred_region
        %s137 = sadd.s32 %s17, %s18
        %s138 = smul.u32 2, %s137
        %p139 = scmp.lt.s32.totalorder %s138, 3
        %s140 = scalar_select %p139, %s138, 3
        %s141 = smul.addr %s140, 8
        %s142 = scalar_lea.vmem %s2, %s141
        %s143 = sadd.s32 %s17, %s18
        %s144 = smul.u32 2, %s143
      $region24: #{loss_binary.1} parent=15 // pred_fallthru
        _
    $region16: #{loss_binary.1} parent=5 // pred_fallthru
      _
    %p145 = scmp.le.s32.totalorder 1, %s10
    %p146 = scmp.lt.s32.totalorder %s10, 3
    %p147 = pnand %p145, %p146
    %p148 = pneg %p147
    // Predicated region
    $region25: #{loss_binary.1} parent=5 // pred_check
      _
    $region26: #{loss_binary.1} parent=5 // pred_check_branch
      %150 = sbr.rel (%p147) target = $region28
    $region27: #{loss_binary.1} parent=5 // pred_region
      %s151 = ssub.s32 %s10, 1
      %s152 = sadd.s32 %s19, %s20
      %s153 = smul.u32 2, %s152
      %p154 = scmp.lt.s32.totalorder %s153, 3
      %s155 = scalar_select %p154, %s153, 3
      %s156 = smul.addr %s155, 8
      %s157 = scalar_lea.vmem %s1, %s156
      %p158 = pneg %p50
      %p159 = pneg %p47
      %s160 = sadd.s32 %s19, %s20
      %s161 = smul.u32 2, %s160
      %p162 = scmp.lt.s32.totalorder %s161, 3
      %s163 = scalar_select %p162, %s161, 3
      %s164 = smul.addr %s163, 8
      %s165 = scalar_lea.vmem %s2, %s164
      %p166 = pneg %p78
      %p167 = pneg %p75
      %p168 = pneg %p104
      %p169 = pneg %p101
      %p170 = scmp.lt.s32.totalorder %s19, 1
      %s171 = scalar_select %p170, %s19, 1
      %s172 = smul.addr %s171, 8
      %s173 = scalar_lea.vmem %s3, %s172
      %s174 = sadd.s32 %s19, %s20
      %s175 = smul.u32 2, %s174
      %p176 = scmp.lt.s32.totalorder %s175, 3
      %s177 = scalar_select %p176, %s175, 3
      %s178 = smul.addr %s177, 8
      %s179 = scalar_lea.vmem %s1, %s178
      %s180 = sadd.s32 %s19, %s20
      %s181 = smul.u32 2, %s180
      %s182 = sadd.s32 %s19, %s20
      %s183 = smul.u32 2, %s182
      %p184 = scmp.lt.s32.totalorder %s183, 3
      %s185 = scalar_select %p184, %s183, 3
      %s186 = smul.addr %s185, 8
      %s187 = scalar_lea.vmem %s2, %s186
      %s188 = sadd.s32 %s19, %s20
      %s189 = smul.u32 2, %s188
      %p190 = scmp.lt.s32.totalorder %s19, 1
      %s191 = scalar_select %p190, %s19, 1
      %s192 = smul.addr %s191, 8
      %s193 = scalar_lea.vmem %s3, %s192
      %p194 = scmp.eq.s32.totalorder %s20, 0
      // Predicated region
      $region29: #{loss_binary.1} parent=27 // pred_check
        %p195 = pneg %p194
      $region30: #{loss_binary.1} parent=27 // pred_check_branch
        %197 = sbr.rel (%p195) target = $region32
      $region31: #{loss_binary.1} parent=27 // pred_region
        %198 = vst [vmem:[%s193] sm:$0xff] 0.0
      $region32: #{loss_binary.1} parent=27 // pred_fallthru
        _
      %v199 = vld [vmem:[%s179] sm:$0xff]
      %v200 = vld [vmem:[%s179 + $0x8] sm:$0xff]
      %v201 = vld [vmem:[%s187] sm:$0xff]
      %v202 = vld [vmem:[%s187 + $0x8] sm:$0xff]
      %s203 = sadd.s32 %s19, %s20
      %s204 = smul.u32 %s203, 2048
      %v205 = vlaneseq
      %v206 = vshrl.u32 %v205, 7
      %v207 = vadd.s32 %v206, 8
      %v208 = vlaneseq
      %v209 = vand.u32 %v208, 127
      %v210 = vmul.u32 %v206, 128
      %v211 = vmul.u32 %v207, 128
      %v212 = vstv %s204
      %v213 = vadd.s32 %v212, %v210
      %v214 = vadd.s32 %v212, %v211
      %v215 = vadd.s32 %v213, %v209
      %v216 = vadd.s32 %v214, %v209
      %s217 = sld [smem:[#allocation3]]
      %v218 = vstv %s217
      %vm219 = vcmp.lt.s32.totalorder %v215, %v218
      %vm220 = vcmp.lt.s32.totalorder %v216, %v218
      %v221 = vand.u32 2147483647, %v199
      %v222 = vand.u32 2147483647, %v200
      %v223 = vsub.f32 0.0, %v221
      %v224 = vsub.f32 0.0, %v222
      %v225 = vmul.f32 %v223, 1.442695
      %v226 = vpow.pop %v225
      %v227 = vmul.f32 %v224, 1.442695
      %v228 = vpow.pop %v227
      %v229 = vmax.f32 %v199, 0.0
      %v230 = vmax.f32 %v200, 0.0
      %v231 = vmul.f32 %v199, %v201
      %v232 = vmul.f32 %v200, %v202
      %v233 = vsub.f32 %v229, %v231
      %v234 = vsub.f32 %v230, %v232
      %v235 = vadd.f32 %v226, 1.0
      %v236 = vlog2.pop %v235
      %v237 = vmul.f32 %v236, 0.6931472
      %v238 = vmul.f32 -0.5, %v226
      %v239 = vadd.f32 %v238, 1.0
      %v240 = vmul.f32 %v239, %v226
      %v241 = vand.u32 2147483647, %v226
      %vm242 = vcmp.lt.f32.partialorder %v241, 0.0004427343
      %v243 = vsel %vm242, %v240, %v237
      %v244 = vadd.f32 %v228, 1.0
      %v245 = vlog2.pop %v244
      %v246 = vmul.f32 %v245, 0.6931472
      %v247 = vmul.f32 -0.5, %v228
      %v248 = vadd.f32 %v247, 1.0
      %v249 = vmul.f32 %v248, %v228
      %v250 = vand.u32 2147483647, %v228
      %vm251 = vcmp.lt.f32.partialorder %v250, 0.0004427343
      %v252 = vsel %vm251, %v249, %v246
      %v253 = vadd.f32 %v233, %v243
      %v254 = vadd.f32 %v234, %v252
      %v255 = vsel %vm219, %v253, 0.0
      %v256 = vsel %vm220, %v254, 0.0
      %v257 = vld [vmem:[%s193] sm:$0xff]
      %v258 = vadd.f32 %v255, %v256
      %v259 = vadd.f32 %v257, %v258
      %260 = vst [vmem:[%s193] sm:$0xff] %v259
      %p261 = scmp.lt.s32.totalorder %s19, 1
      %s262 = scalar_select %p261, %s19, 1
      %s263 = smul.addr %s262, 8
      %s264 = scalar_lea.vmem %s3, %s263
      // Predicated region
      $region33: #{loss_binary.1} parent=27 // pred_check
        %p265 = pneg %p101
      $region34: #{loss_binary.1} parent=27 // pred_check_branch
        %267 = sbr.rel (%p265) target = $region36
      $region35: #{loss_binary.1} parent=27 // pred_region
        _
      $region36: #{loss_binary.1} parent=27 // pred_fallthru
        _
    $region28: #{loss_binary.1} parent=5 // pred_fallthru
      _
    %p268 = scmp.le.s32.totalorder 2, %s10
    // Predicated region
    $region37: #{loss_binary.1} parent=5 // pred_check
      %p269 = pneg %p268
    $region38: #{loss_binary.1} parent=5 // pred_check_branch
      %271 = sbr.rel (%p269) target = $region40
    $region39: #{loss_binary.1} parent=5 // pred_region
      %s272 = ssub.s32 %s10, 2
      // Predicated region
      $region41: #{loss_binary.1} parent=39 // pred_check
        %p273 = pneg %p107
      $region42: #{loss_binary.1} parent=39 // pred_check_branch
        %275 = sbr.rel (%p273) target = $region44
      $region43: #{loss_binary.1} parent=39 // pred_region
        %p276 = scmp.lt.s32.totalorder %s21, 1
        %s277 = scalar_select %p276, %s21, 1
        %s278 = smul.addr %s277, 8
        %s279 = scalar_lea.vmem %s3, %s278
      $region44: #{loss_binary.1} parent=39 // pred_fallthru
        _
    $region40: #{loss_binary.1} parent=5 // pred_fallthru
      _
  $region6: #{loss_binary.1} parent=0 // loop_footer
    %s14 = sadd.s32 1, %s10
  $region7: #{loss_binary.1} parent=0 // loop_footer_branch
    %9 = sbr.rel target = $region3
  $region8: #{loss_binary.1} parent=0 // loop_exit
    _

</llo_original>
